<compile_context>
chip_gen: v6e
topology: v6e:2x2x1
jax: 0.10.0
libtpu: 0.0.40
codegen_flags: <defaults>
</compile_context>

<pallas_src>
import functools

import numpy as np
import jax
import jax.numpy as jnp
from jax.experimental import pallas as pl
from jax.experimental.pallas import tpu as pltpu


# ----------------------------- Pallas kernel ------------------------------ #
def _embed_pack_kernel(idx_ref, table_ref, out_ref):
    """One-hot gather that writes output already packed in row-major (B*F, D) order.

    idx_ref:   (ROWS, 1)       int32 -- permuted global row indices into the packed table
    table_ref: (Vp, D)         f32   -- packed embedding table (grid-invariant, resident)
    out_ref:   (ROWS//P, P*D)  f32   -- P = 128//D original rows packed per 128-lane row
    """
    vp, d = table_ref.shape
    rows = idx_ref.shape[0]
    pack = out_ref.shape[1] // d
    q = rows // pack
    table = table_ref[...]
    # Hoisted: one iota build, reused by every sub-chunk (JAX does not CSE broadcasts).
    iota = jax.lax.broadcasted_iota(jnp.int32, (q, vp), 1)
    for sub in range(pack):
        idx_col = idx_ref[sub * q:(sub + 1) * q, :]                   # (Q, 1) int32
        onehot = (iota == idx_col).astype(jnp.float32)                # (Q, Vp) on the VPU
        # Exact row selection on the MXU.  The lane-slice store below is VMEM-local; the
        # HBM writeback of the whole (ROWS//P, P*D) output block stays fully lane-dense.
        out_ref[:, sub * d:(sub + 1) * d] = jnp.dot(
            onehot, table, preferred_element_type=jnp.float32)        # (Q, D)


# ------------------------------ Wrapper ----------------------------------- #
def _round_up(x, m):
    return ((x + m - 1) // m) * m


def _num_tensorcores():
    """Megacore chips (2 TensorCores behind one Pallas grid) vs single-TC chips."""
    try:
        kind = jax.devices()[0].device_kind.lower()
        if ("v4" in kind) or ("v5p" in kind) or ("v7" in kind):
            return 2
    except Exception:
        pass
    return 1


def features_embedding_forward(x, packed_table, offsets, *, rows_per_tile=512):
    """x: (B, F) int32, packed_table: (Vp, D) f32, offsets: (F,) int32 -> (B, F, D) f32."""
    B, F = x.shape
    Vp, D = packed_table.shape
    rows_per_tile = _round_up(max(int(rows_per_tile), 128), 128)

    # Flattened global row indices (row-major over (batch, field)).
    # NOTE: an out-of-range index in field f reads into field f+1's sub-table (or gathers
    # zeros if globally out of range); nn.Embedding would raise instead.  Clamp per-field
    # upstream if strict parity with that error behavior is needed.
    flat_idx = (x.astype(jnp.int32) + offsets[None, :]).reshape(-1)          # (N,)
    N = flat_idx.shape[0]

    # Row tile: lane-dense (multiple of 128), capped at rows_per_tile (sweep 256/512/1024;
    # per-grid-step overhead and DMA granularity bind here, not the MXU).  Only force a
    # >= 2-step grid on multi-TC chips, where ("parallel",) shards steps across cores.
    rows = min(rows_per_tile, _round_up(N, 128))
    if _num_tensorcores() >= 2 and N > 128 and pl.cdiv(N, rows) < 2:
        rows = max(128, _round_up(pl.cdiv(N, 2), 128))
    n_pad = _round_up(N, rows)
    n_steps = n_pad // rows

    # Pack factor: P original output rows share one 128-lane output row, so the kernel's
    # output block is lane-dense AND already row-major (B, F, D) when flattened.
    pack = 128 // D if (128 % D == 0 and (rows // (128 // D)) % 8 == 0) else 1
    q = rows // pack

    # Padded rows use index 0 (they gather a real row and are sliced off below, even
    # though the per-tile permutation interleaves them inside the last tile).
    flat_idx = jnp.pad(flat_idx, (0, n_pad - N))
    # Per-tile permutation: kernel position sub*Q + i holds original local row P*i + sub.
    # This is what makes the packed output block exactly row-major.  O(N) int32 XLA work.
    idx_shipped = flat_idx.reshape(n_steps, q, pack).transpose(0, 2, 1).reshape(n_pad, 1)

    # VMEM budget (bytes): resident table (lane-padded, double-buffered by default),
    # one-hot temp, idx/out blocks (x2 double buffering), matmul result, then headroom.
    table_buf = Vp * max(D, 128) * 4
    vmem_needed = (2 * table_buf + 2 * q * Vp * 4 + 2 * rows * 128 * 4
                   + 2 * q * pack * D * 4 + q * max(D, 128) * 4)
    vmem_limit = int(min(max(4 * vmem_needed, 16 * 1024 * 1024), 64 * 1024 * 1024))

    cost = pl.CostEstimate(
        flops=2 * n_pad * Vp * D,
        transcendentals=0,
        bytes_accessed=n_pad * 4 + Vp * D * 4 + n_pad * D * 4,
    )

    out_packed = pl.pallas_call(
        _embed_pack_kernel,
        out_shape=jax.ShapeDtypeStruct((n_pad // pack, pack * D), jnp.float32),
        grid_spec=pltpu.PrefetchScalarGridSpec(
            num_scalar_prefetch=0,
            grid=(n_steps,),
            in_specs=[
                pl.BlockSpec((rows, 1), lambda i: (i, 0)),   # index column, one tile/step
                # Grid-invariant resident table.  TODO(synk): mark pipeline_mode=
                # pl.Buffered(1) (single buffer) once Vp grows enough for the default
                # double-buffer to matter (negligible at Vp=512 / 64 KiB).
                pl.BlockSpec((Vp, D), lambda i: (0, 0)),
            ],
            out_specs=pl.BlockSpec((rows // pack, pack * D), lambda i: (i, 0)),
        ),
        compiler_params=pltpu.CompilerParams(
            dimension_semantics=("parallel",),
            vmem_limit_bytes=vmem_limit,
        ),
        cost_estimate=cost,
    )(idx_shipped, packed_table)

    # Free row-major reshape + tail slice; no transpose, no extra HBM round trip.
    return out_packed.reshape(n_pad, D)[:N].reshape(B, F, D)


# --------------------- Parameter / table construction ---------------------- #
def build_packed_tables(embedding_dim, n_unique_dict, n_ages, key):
    """Per-field tables (N(0,1) init, like nn.Embedding default) in FeaturesEmbedding's
    forward field order, concatenated along the vocab axis, zero-padded to a 128-multiple
    vocab.  Returned as (Vp, D) plus per-field offsets."""
    vocab_sizes = [
        n_unique_dict["n_customers"] + 1,              # 0 customer
        n_unique_dict["n_products"] + 1,               # 1 product
        n_unique_dict["n_prices"] + 2,                 # 2 price
        n_unique_dict["n_sales_channels"] + 1,         # 3 sales_channel_id
        n_unique_dict["n_days"] + 1,                   # 4 day
        n_unique_dict["n_months"] + 1,                 # 5 month
        n_unique_dict["n_year"] + 1,                   # 6 year
        n_unique_dict["n_seasons"] + 1,                # 7 season
        n_unique_dict["n_prod_names"] + 1,             # 8 prod_name
        n_unique_dict["n_graphical"] + 1,              # 9 graphical
        n_unique_dict["n_colours"] + 1,                # 10 colour
        n_unique_dict["n_departments"] + 1,            # 11 department
        n_unique_dict["n_club_member_status"] + 1,     # 12 club_member_status
        n_unique_dict["n_fashion_news_frequency"] + 1, # 13 fashion_news_frequency
        n_ages + 2,                                    # 14 age
        n_unique_dict["n_postal"] + 1,                 # 15 postal_code
    ]
    keys = jax.random.split(key, len(vocab_sizes))
    tables = [jax.random.normal(k, (v, embedding_dim), dtype=jnp.float32)
              for k, v in zip(keys, vocab_sizes)]
    packed = jnp.concatenate(tables, axis=0)                       # (V_total, D)
    v_total = packed.shape[0]
    v_pad = _round_up(v_total, 128)                                # lane-align contraction
    packed = jnp.pad(packed, ((0, v_pad - v_total), (0, 0)))       # (Vp, D)
    offsets = jnp.asarray(
        np.concatenate([[0], np.cumsum(np.asarray(vocab_sizes[:-1]))]).astype(np.int32))
    return packed, offsets, vocab_sizes, tables


# --------------------------------- Main ------------------------------------ #
if __name__ == "__main__":
    embedding_dim = 32
    n_ages = 111
    n_unique_dict = {
        "n_customers": 50, "n_products": 40, "n_prices": 20, "n_colours": 10,
        "n_departments": 12, "n_prod_names": 30, "n_sales_channels": 2,
        "n_seasons": 4, "n_days": 31, "n_months": 12, "n_year": 3,
        "n_club_member_status": 3, "n_fashion_news_frequency": 4,
        "n_postal": 25, "n_graphical": 15,
    }
    num_fields = list(range(17))  # len(num_fields) - 1 == 16 fields, as in the module

    key = jax.random.PRNGKey(0)
    kparams, kx = jax.random.split(key)
    packed_table, offsets, vocab_sizes, tables = build_packed_tables(
        embedding_dim, n_unique_dict, n_ages, kparams)

    # Deterministic example input: (B, 16) int32, each column within its field's vocab.
    B = 2
    F = len(vocab_sizes)
    col_keys = jax.random.split(kx, F)
    cols = [jax.random.randint(col_keys[f], (B,), 0, vocab_sizes[f], dtype=jnp.int32)
            for f in range(F)]
    x = jnp.stack(cols, axis=1)                                    # (B, 16) int32

    fwd = jax.jit(functools.partial(features_embedding_forward,
                                    packed_table=packed_table, offsets=offsets))
    out = jax.block_until_ready(fwd(x))

    # Reference check in plain JAX (same semantics as the torch forward).
    ref = jnp.stack([tables[f][x[:, f]] for f in range(F)], axis=1).astype(jnp.float32)
    assert out.shape == (B, F, embedding_dim) and out.dtype == jnp.float32
    assert jnp.allclose(out, ref, atol=1e-5), "mismatch vs reference gather"

    print("KERNEL_OK")
</pallas_src>

<mosaic_0001>
module attributes {stable_mosaic.version = 11 : i64} {
  func.func @_embed_pack_kernel(%arg0: i32, %arg1: memref<128x1xi32, #tpu.memory_space<vmem>>, %arg2: memref<512x32xf32, #tpu.memory_space<vmem>>, %arg3: memref<32x128xf32, #tpu.memory_space<vmem>>) attributes {dimension_semantics = [#tpu.dimension_semantics<parallel>], iteration_bounds = array<i64: 1>, scalar_prefetch = 0 : i64, scratch_operands = 0 : i64, tpu.core_type = #tpu.core_type<tc>, window_params = [{transform_indices = @transform_0, window_bounds = array<i64: 128, 1>}, {pipeline_mode = #tpu.pipeline_mode<synchronous>, transform_indices = @transform_1, window_bounds = array<i64: 512, 32>}, {transform_indices = @transform_2, window_bounds = array<i64: 32, 128>}]} {
    %c0 = arith.constant 0 : index
    %c0_0 = arith.constant 0 : index
    %0 = vector.load %arg2[%c0, %c0_0] : memref<512x32xf32, #tpu.memory_space<vmem>>, vector<512x32xf32>
    %1 = tpu.iota {dimensions = array<i32: 1>} : vector<32x512xi32>
    %c0_1 = arith.constant 0 : index
    %c0_2 = arith.constant 0 : index
    %2 = vector.load %arg1[%c0_1, %c0_2] : memref<128x1xi32, #tpu.memory_space<vmem>>, vector<32x1xi32>
    %3 = vector.broadcast %2 : vector<32x1xi32> to vector<32x512xi32>
    %4 = arith.cmpi eq, %1, %3 : vector<32x512xi32>
    %5 = arith.extui %4 : vector<32x512xi1> to vector<32x512xi32>
    %6 = arith.sitofp %5 : vector<32x512xi32> to vector<32x512xf32>
    %cst = arith.constant dense<0.000000e+00> : vector<32x32xf32>
    %7 = tpu.matmul %6, %0, %cst {dimension_numbers = #tpu.dot_dimension_numbers<[1], [0], [0], [1], [0, 0, 1, 1], [], []>} : vector<32x512xf32>, vector<512x32xf32>, vector<32x32xf32> -> vector<32x32xf32>
    %c0_3 = arith.constant 0 : index
    %c0_4 = arith.constant 0 : index
    %8 = vector.load %arg3[%c0_3, %c0_4] : memref<32x128xf32, #tpu.memory_space<vmem>>, vector<32x32xf32>
    tpu.vector_store %arg3[%c0_3, %c0_4], %7 {strides = array<i32>} : memref<32x128xf32, #tpu.memory_space<vmem>>, vector<32x32xf32>,
    %c32 = arith.constant 32 : index
    %c0_5 = arith.constant 0 : index
    %9 = vector.load %arg1[%c32, %c0_5] : memref<128x1xi32, #tpu.memory_space<vmem>>, vector<32x1xi32>
    %10 = vector.broadcast %9 : vector<32x1xi32> to vector<32x512xi32>
    %11 = arith.cmpi eq, %1, %10 : vector<32x512xi32>
    %12 = arith.extui %11 : vector<32x512xi1> to vector<32x512xi32>
    %13 = arith.sitofp %12 : vector<32x512xi32> to vector<32x512xf32>
    %cst_6 = arith.constant dense<0.000000e+00> : vector<32x32xf32>
    %14 = tpu.matmul %13, %0, %cst_6 {dimension_numbers = #tpu.dot_dimension_numbers<[1], [0], [0], [1], [0, 0, 1, 1], [], []>} : vector<32x512xf32>, vector<512x32xf32>, vector<32x32xf32> -> vector<32x32xf32>
    %c0_7 = arith.constant 0 : index
    %c32_8 = arith.constant 32 : index
    %15 = vector.load %arg3[%c0_7, %c32_8] : memref<32x128xf32, #tpu.memory_space<vmem>>, vector<32x32xf32>
    tpu.vector_store %arg3[%c0_7, %c32_8], %14 {strides = array<i32>} : memref<32x128xf32, #tpu.memory_space<vmem>>, vector<32x32xf32>,
    %c64 = arith.constant 64 : index
    %c0_9 = arith.constant 0 : index
    %16 = vector.load %arg1[%c64, %c0_9] : memref<128x1xi32, #tpu.memory_space<vmem>>, vector<32x1xi32>
    %17 = vector.broadcast %16 : vector<32x1xi32> to vector<32x512xi32>
    %18 = arith.cmpi eq, %1, %17 : vector<32x512xi32>
    %19 = arith.extui %18 : vector<32x512xi1> to vector<32x512xi32>
    %20 = arith.sitofp %19 : vector<32x512xi32> to vector<32x512xf32>
    %cst_10 = arith.constant dense<0.000000e+00> : vector<32x32xf32>
    %21 = tpu.matmul %20, %0, %cst_10 {dimension_numbers = #tpu.dot_dimension_numbers<[1], [0], [0], [1], [0, 0, 1, 1], [], []>} : vector<32x512xf32>, vector<512x32xf32>, vector<32x32xf32> -> vector<32x32xf32>
    %c0_11 = arith.constant 0 : index
    %c64_12 = arith.constant 64 : index
    %22 = vector.load %arg3[%c0_11, %c64_12] : memref<32x128xf32, #tpu.memory_space<vmem>>, vector<32x32xf32>
    tpu.vector_store %arg3[%c0_11, %c64_12], %21 {strides = array<i32>} : memref<32x128xf32, #tpu.memory_space<vmem>>, vector<32x32xf32>,
    %c96 = arith.constant 96 : index
    %c0_13 = arith.constant 0 : index
    %23 = vector.load %arg1[%c96, %c0_13] : memref<128x1xi32, #tpu.memory_space<vmem>>, vector<32x1xi32>
    %24 = vector.broadcast %23 : vector<32x1xi32> to vector<32x512xi32>
    %25 = arith.cmpi eq, %1, %24 : vector<32x512xi32>
    %26 = arith.extui %25 : vector<32x512xi1> to vector<32x512xi32>
    %27 = arith.sitofp %26 : vector<32x512xi32> to vector<32x512xf32>
    %cst_14 = arith.constant dense<0.000000e+00> : vector<32x32xf32>
    %28 = tpu.matmul %27, %0, %cst_14 {dimension_numbers = #tpu.dot_dimension_numbers<[1], [0], [0], [1], [0, 0, 1, 1], [], []>} : vector<32x512xf32>, vector<512x32xf32>, vector<32x32xf32> -> vector<32x32xf32>
    %c0_15 = arith.constant 0 : index
    %c96_16 = arith.constant 96 : index
    %29 = vector.load %arg3[%c0_15, %c96_16] : memref<32x128xf32, #tpu.memory_space<vmem>>, vector<32x32xf32>
    tpu.vector_store %arg3[%c0_15, %c96_16], %28 {strides = array<i32>} : memref<32x128xf32, #tpu.memory_space<vmem>>, vector<32x32xf32>,
    return
  }
  func.func @transform_0(%arg0: i32) -> (i32, i32) {
    %c0_i32 = arith.constant 0 : i32
    %c0_i32_0 = arith.constant 0 : i32
    return %arg0, %c0_i32 : i32, i32
  }
  func.func @transform_1(%arg0: i32) -> (i32, i32) {
    %c0_i32 = arith.constant 0 : i32
    %c0_i32_0 = arith.constant 0 : i32
    %c0_i32_1 = arith.constant 0 : i32
    return %c0_i32, %c0_i32_0 : i32, i32
  }
  func.func @transform_2(%arg0: i32) -> (i32, i32) {
    %c0_i32 = arith.constant 0 : i32
    %c0_i32_0 = arith.constant 0 : i32
    return %arg0, %c0_i32 : i32, i32
  }
}

</mosaic_0001>

<llo_original>
// kernel: features_embedding_forward.1
$region0: #{features_embedding_forward.1}
  #allocation0 [shape = 'u32[]', space=smem, size = 0x4, offset = 0x4, fixed_abs, tag = 'smem constant byte address 0x4 - core index']
  #allocation1 [shape = 'u32[144,128]{1,0:T(1,128)}', space=vmem, size = 0x12000, scoped, tag = 'internal scratch']
  %s0 = inlined_call_operand.vmem [shape: s32[128,1], index: 0, kind: input, shape index: {}]
  %s1 = inlined_call_operand.hbm [shape: f32[512,32], index: 1, kind: input, shape index: {}]
  %s2 = inlined_call_operand.vmem [shape: f32[32,128], index: 2, kind: output, shape index: {}]
  %s3 = sld [smem:[#allocation0]]
  $region22: #{features_embedding_forward.1} parent=0
    _
  %s5 = ssub.s32 1, %s3
  %s6 = scalar_select 0, %s5, %s3
  $region1: #{features_embedding_forward.1} parent=0
    #allocation2 [shape = 'u8[262144]{0}', space=vmem, size = 0x40000, scoped, tag = 'input window, operand 1, single buffered']
    #allocation3 [shape = 's32[1]{0}', space=sflag, size = 0x4, scoped, tag = 'scoped memory for features_embedding_forward.1']
    %7 = vsyncpa [#allocation3], 0
    // Predicated region
    $region2: #{features_embedding_forward.1} parent=1 // pred_check
      _
    $region3: #{features_embedding_forward.1} parent=1 // pred_check_branch
      %9 = sbr.rel (0) target = $region5
    $region4: #{features_embedding_forward.1} parent=1 // pred_region
      _
    $region5: #{features_embedding_forward.1} parent=1 // pred_fallthru
      _
    // Predicated region
    $region6: #{features_embedding_forward.1} parent=1 // pred_check
      _
    $region7: #{features_embedding_forward.1} parent=1 // pred_check_branch
      %11 = sbr.rel (0) target = $region9
    $region8: #{features_embedding_forward.1} parent=1 // pred_region
      %s13 = ssub.s32 8192, 8192
      %14 = vsyncadd [#allocation3], %s13
      %s15 = sshll.u32 [#allocation2], 4
      %s16 = int_to_ptr.vmem [resolvable:$true] %s15
      %21 = dma.hbm_to_vmem [thread:$0]  %s1, 8192, %s16, [#allocation3], 128, 128, 8
    $region9: #{features_embedding_forward.1} parent=1 // pred_fallthru
      _
    // Predicated region
    $region10: #{features_embedding_forward.1} parent=1 // pred_check
      _
    $region11: #{features_embedding_forward.1} parent=1 // pred_check_branch
      %23 = sbr.rel (0) target = $region13
    $region12: #{features_embedding_forward.1} parent=1 // pred_region
      %24 = dma.done [#allocation3], 8192
    $region13: #{features_embedding_forward.1} parent=1 // pred_fallthru
      _
    %v25 = vld [vmem:[#allocation2] sm:$0xff]
    %v26 = vld [vmem:[#allocation2 + $0x8] sm:$0xff]
    %v27 = vld [vmem:[#allocation2 + $0x10] sm:$0xff]
    %v28 = vld [vmem:[#allocation2 + $0x18] sm:$0xff]
    %v29 = vld [vmem:[#allocation2 + $0x20] sm:$0xff]
    %v30 = vld [vmem:[#allocation2 + $0x28] sm:$0xff]
    %v31 = vld [vmem:[#allocation2 + $0x30] sm:$0xff]
    %v32 = vld [vmem:[#allocation2 + $0x38] sm:$0xff]
    %v33 = vld [vmem:[#allocation2 + $0x40] sm:$0xff]
    %v34 = vld [vmem:[#allocation2 + $0x48] sm:$0xff]
    %v35 = vld [vmem:[#allocation2 + $0x50] sm:$0xff]
    %v36 = vld [vmem:[#allocation2 + $0x58] sm:$0xff]
    %v37 = vld [vmem:[#allocation2 + $0x60] sm:$0xff]
    %v38 = vld [vmem:[#allocation2 + $0x68] sm:$0xff]
    %v39 = vld [vmem:[#allocation2 + $0x70] sm:$0xff]
    %v40 = vld [vmem:[#allocation2 + $0x78] sm:$0xff]
    %v41 = vld [vmem:[#allocation2 + $0x80] sm:$0xff]
    %v42 = vld [vmem:[#allocation2 + $0x88] sm:$0xff]
    %v43 = vld [vmem:[#allocation2 + $0x90] sm:$0xff]
    %v44 = vld [vmem:[#allocation2 + $0x98] sm:$0xff]
    %v45 = vld [vmem:[#allocation2 + $0xa0] sm:$0xff]
    %v46 = vld [vmem:[#allocation2 + $0xa8] sm:$0xff]
    %v47 = vld [vmem:[#allocation2 + $0xb0] sm:$0xff]
    %v48 = vld [vmem:[#allocation2 + $0xb8] sm:$0xff]
    %v49 = vld [vmem:[#allocation2 + $0xc0] sm:$0xff]
    %v50 = vld [vmem:[#allocation2 + $0xc8] sm:$0xff]
    %v51 = vld [vmem:[#allocation2 + $0xd0] sm:$0xff]
    %v52 = vld [vmem:[#allocation2 + $0xd8] sm:$0xff]
    %v53 = vld [vmem:[#allocation2 + $0xe0] sm:$0xff]
    %v54 = vld [vmem:[#allocation2 + $0xe8] sm:$0xff]
    %v55 = vld [vmem:[#allocation2 + $0xf0] sm:$0xff]
    %v56 = vld [vmem:[#allocation2 + $0xf8] sm:$0xff]
    %v57 = vld [vmem:[#allocation2 + $0x100] sm:$0xff]
    %v58 = vld [vmem:[#allocation2 + $0x108] sm:$0xff]
    %v59 = vld [vmem:[#allocation2 + $0x110] sm:$0xff]
    %v60 = vld [vmem:[#allocation2 + $0x118] sm:$0xff]
    %v61 = vld [vmem:[#allocation2 + $0x120] sm:$0xff]
    %v62 = vld [vmem:[#allocation2 + $0x128] sm:$0xff]
    %v63 = vld [vmem:[#allocation2 + $0x130] sm:$0xff]
    %v64 = vld [vmem:[#allocation2 + $0x138] sm:$0xff]
    %v65 = vld [vmem:[#allocation2 + $0x140] sm:$0xff]
    %v66 = vld [vmem:[#allocation2 + $0x148] sm:$0xff]
    %v67 = vld [vmem:[#allocation2 + $0x150] sm:$0xff]
    %v68 = vld [vmem:[#allocation2 + $0x158] sm:$0xff]
    %v69 = vld [vmem:[#allocation2 + $0x160] sm:$0xff]
    %v70 = vld [vmem:[#allocation2 + $0x168] sm:$0xff]
    %v71 = vld [vmem:[#allocation2 + $0x170] sm:$0xff]
    %v72 = vld [vmem:[#allocation2 + $0x178] sm:$0xff]
    %v73 = vld [vmem:[#allocation2 + $0x180] sm:$0xff]
    %v74 = vld [vmem:[#allocation2 + $0x188] sm:$0xff]
    %v75 = vld [vmem:[#allocation2 + $0x190] sm:$0xff]
    %v76 = vld [vmem:[#allocation2 + $0x198] sm:$0xff]
    %v77 = vld [vmem:[#allocation2 + $0x1a0] sm:$0xff]
    %v78 = vld [vmem:[#allocation2 + $0x1a8] sm:$0xff]
    %v79 = vld [vmem:[#allocation2 + $0x1b0] sm:$0xff]
    %v80 = vld [vmem:[#allocation2 + $0x1b8] sm:$0xff]
    %v81 = vld [vmem:[#allocation2 + $0x1c0] sm:$0xff]
    %v82 = vld [vmem:[#allocation2 + $0x1c8] sm:$0xff]
    %v83 = vld [vmem:[#allocation2 + $0x1d0] sm:$0xff]
    %v84 = vld [vmem:[#allocation2 + $0x1d8] sm:$0xff]
    %v85 = vld [vmem:[#allocation2 + $0x1e0] sm:$0xff]
    %v86 = vld [vmem:[#allocation2 + $0x1e8] sm:$0xff]
    %v87 = vld [vmem:[#allocation2 + $0x1f0] sm:$0xff]
    %v88 = vld [vmem:[#allocation2 + $0x1f8] sm:$0xff]
    %v89 = vlaneseq
    %v90 = vand.u32 %v89, 127
    %v91 = vadd.s32 %v90, 128
    %v92 = vadd.s32 %v90, 256
    %v93 = vadd.s32 %v90, 384
    %v94 = vld [vmem:[%s0] sm:$0xff]
    %v95 = vld [vmem:[%s0 + $0x8] sm:$0xff]
    %v96 = vld [vmem:[%s0 + $0x10] sm:$0xff]
    %v97 = vld [vmem:[%s0 + $0x18] sm:$0xff]
    %98 = vset.pattern.permute.xlu0 0
    %99 = vperm.xlu0 %98, %v94
    %v100 = vpop.permute.xlu0 %99
    %101 = vset.pattern.permute.xlu0 0
    %102 = vperm.xlu0 %101, %v95
    %v103 = vpop.permute.xlu0 %102
    %104 = vset.pattern.permute.xlu0 0
    %105 = vperm.xlu0 %104, %v96
    %v106 = vpop.permute.xlu0 %105
    %107 = vset.pattern.permute.xlu0 0
    %108 = vperm.xlu0 %107, %v97
    %v109 = vpop.permute.xlu0 %108
    %vm110 = vcmp.eq.s32.totalorder %v90, %v100
    %vm111 = vcmp.eq.s32.totalorder %v91, %v100
    %vm112 = vcmp.eq.s32.totalorder %v92, %v100
    %vm113 = vcmp.eq.s32.totalorder %v93, %v100
    %vm114 = vcmp.eq.s32.totalorder %v90, %v103
    %vm115 = vcmp.eq.s32.totalorder %v91, %v103
    %vm116 = vcmp.eq.s32.totalorder %v92, %v103
    %vm117 = vcmp.eq.s32.totalorder %v93, %v103
    %vm118 = vcmp.eq.s32.totalorder %v90, %v106
    %vm119 = vcmp.eq.s32.totalorder %v91, %v106
    %vm120 = vcmp.eq.s32.totalorder %v92, %v106
    %vm121 = vcmp.eq.s32.totalorder %v93, %v106
    %vm122 = vcmp.eq.s32.totalorder %v90, %v109
    %vm123 = vcmp.eq.s32.totalorder %v91, %v109
    %vm124 = vcmp.eq.s32.totalorder %v92, %v109
    %vm125 = vcmp.eq.s32.totalorder %v93, %v109
    %v126 = vsel %vm110, 1, 0
    %v127 = vsel %vm111, 1, 0
    %v128 = vsel %vm112, 1, 0
    %v129 = vsel %vm113, 1, 0
    %v130 = vsel %vm114, 1, 0
    %v131 = vsel %vm115, 1, 0
    %v132 = vsel %vm116, 1, 0
    %v133 = vsel %vm117, 1, 0
    %v134 = vsel %vm118, 1, 0
    %v135 = vsel %vm119, 1, 0
    %v136 = vsel %vm120, 1, 0
    %v137 = vsel %vm121, 1, 0
    %v138 = vsel %vm122, 1, 0
    %v139 = vsel %vm123, 1, 0
    %v140 = vsel %vm124, 1, 0
    %v141 = vsel %vm125, 1, 0
    %v142 = vcvt.s32.f32 %v126
    %v143 = vcvt.s32.f32 %v127
    %v144 = vcvt.s32.f32 %v128
    %v145 = vcvt.s32.f32 %v129
    %v146 = vcvt.s32.f32 %v130
    %v147 = vcvt.s32.f32 %v131
    %v148 = vcvt.s32.f32 %v132
    %v149 = vcvt.s32.f32 %v133
    %v150 = vcvt.s32.f32 %v134
    %v151 = vcvt.s32.f32 %v135
    %v152 = vcvt.s32.f32 %v136
    %v153 = vcvt.s32.f32 %v137
    %v154 = vcvt.s32.f32 %v138
    %v155 = vcvt.s32.f32 %v139
    %v156 = vcvt.s32.f32 %v140
    %v157 = vcvt.s32.f32 %v141
    %158 = vmatprep.subr.mxu0 0.0
    %159 = vmatpush1.msra.mxu0 %v40
    %160 = vmatprep.subr.mxu0 0.0
    %161 = vmatpush1.msra.mxu0 %v39
    %162 = vmatprep.subr.mxu0 0.0
    %163 = vmatpush1.msra.mxu0 %v38
    %164 = vmatprep.subr.mxu0 0.0
    %165 = vmatpush1.msra.mxu0 %v37
    %166 = vmatprep.subr.mxu0 0.0
    %167 = vmatpush1.msra.mxu0 %v36
    %168 = vmatprep.subr.mxu0 0.0
    %169 = vmatpush1.msra.mxu0 %v35
    %170 = vmatprep.subr.mxu0 0.0
    %171 = vmatpush1.msra.mxu0 %v34
    %172 = vmatprep.subr.mxu0 0.0
    %173 = vmatpush1.msra.mxu0 %v33
    %174 = vmatprep.subr.mxu0 0.0
    %175 = vmatpush1.msra.mxu0 %v32
    %176 = vmatprep.subr.mxu0 0.0
    %177 = vmatpush1.msra.mxu0 %v31
    %178 = vmatprep.subr.mxu0 0.0
    %179 = vmatpush1.msra.mxu0 %v30
    %180 = vmatprep.subr.mxu0 0.0
    %181 = vmatpush1.msra.mxu0 %v29
    %182 = vmatprep.subr.mxu0 0.0
    %183 = vmatpush1.msra.mxu0 %v28
    %184 = vmatprep.subr.mxu0 0.0
    %185 = vmatpush1.msra.mxu0 %v27
    %186 = vmatprep.subr.mxu0 0.0
    %187 = vmatpush1.msra.mxu0 %v26
    %188 = vmatprep.subr.mxu0 0.0
    %189 = vmatpush1.msra.mxu0 %v25
    %190 = vmatprep.subr.mxu0 0.0
    %191 = vmatpush2.msra.mxu0 %v56
    %192 = vmatprep.subr.mxu0 0.0
    %193 = vmatpush2.msra.mxu0 %v55
    %194 = vmatprep.subr.mxu0 0.0
    %195 = vmatpush2.msra.mxu0 %v54
    %196 = vmatprep.subr.mxu0 0.0
    %197 = vmatpush2.msra.mxu0 %v53
    %198 = vmatprep.subr.mxu0 0.0
    %199 = vmatpush2.msra.mxu0 %v52
    %200 = vmatprep.subr.mxu0 0.0
    %201 = vmatpush2.msra.mxu0 %v51
    %202 = vmatprep.subr.mxu0 0.0
    %203 = vmatpush2.msra.mxu0 %v50
    %204 = vmatprep.subr.mxu0 0.0
    %205 = vmatpush2.msra.mxu0 %v49
    %206 = vmatprep.subr.mxu0 0.0
    %207 = vmatpush2.msra.mxu0 %v48
    %208 = vmatprep.subr.mxu0 0.0
    %209 = vmatpush2.msra.mxu0 %v47
    %210 = vmatprep.subr.mxu0 0.0
    %211 = vmatpush2.msra.mxu0 %v46
    %212 = vmatprep.subr.mxu0 0.0
    %213 = vmatpush2.msra.mxu0 %v45
    %214 = vmatprep.subr.mxu0 0.0
    %215 = vmatpush2.msra.mxu0 %v44
    %216 = vmatprep.subr.mxu0 0.0
    %217 = vmatpush2.msra.mxu0 %v43
    %218 = vmatprep.subr.mxu0 0.0
    %219 = vmatpush2.msra.mxu0 %v42
    %220 = vmatprep.subr.mxu0 0.0
    %221 = vmatpush2.msra.mxu0 %v41
    %222 = vmatprep.mubr.f32.mxu0 %v143
    %223 = vmatmul.mubr.f32.gmra.mxu0 %v142
    %v224 = vpop.f32.mrf.mxu0
    %v225 = vadd.f32 0.0, %v224
    %v226 = vpop.f32.mrf.mxu0
    %227 = vmatprep.mubr.f32.mxu0 %v147
    %228 = vmatmul.mubr.f32.gmra.mxu0 %v146
    %v229 = vpop.f32.mrf.mxu0
    %v230 = vadd.f32 0.0, %v229
    %v231 = vpop.f32.mrf.mxu0
    %232 = vmatprep.mubr.f32.mxu0 %v151
    %233 = vmatmul.mubr.f32.gmra.mxu0 %v150
    %v234 = vpop.f32.mrf.mxu0
    %v235 = vadd.f32 0.0, %v234
    %v236 = vpop.f32.mrf.mxu0
    %237 = vmatprep.mubr.f32.mxu0 %v155
    %238 = vmatmul.mubr.f32.gmra.mxu0 %v154
    %v239 = vpop.f32.mrf.mxu0
    %v240 = vadd.f32 0.0, %v239
    %v241 = vpop.f32.mrf.mxu0
    %242 = vdwg.mxu0
    %243 = vmatprep.subr.mxu0 0.0
    %244 = vmatpush1.msra.mxu0 %v72
    %245 = vmatprep.subr.mxu0 0.0
    %246 = vmatpush1.msra.mxu0 %v71
    %247 = vmatprep.subr.mxu0 0.0
    %248 = vmatpush1.msra.mxu0 %v70
    %249 = vmatprep.subr.mxu0 0.0
    %250 = vmatpush1.msra.mxu0 %v69
    %251 = vmatprep.subr.mxu0 0.0
    %252 = vmatpush1.msra.mxu0 %v68
    %253 = vmatprep.subr.mxu0 0.0
    %254 = vmatpush1.msra.mxu0 %v67
    %255 = vmatprep.subr.mxu0 0.0
    %256 = vmatpush1.msra.mxu0 %v66
    %257 = vmatprep.subr.mxu0 0.0
    %258 = vmatpush1.msra.mxu0 %v65
    %259 = vmatprep.subr.mxu0 0.0
    %260 = vmatpush1.msra.mxu0 %v64
    %261 = vmatprep.subr.mxu0 0.0
    %262 = vmatpush1.msra.mxu0 %v63
    %263 = vmatprep.subr.mxu0 0.0
    %264 = vmatpush1.msra.mxu0 %v62
    %265 = vmatprep.subr.mxu0 0.0
    %266 = vmatpush1.msra.mxu0 %v61
    %267 = vmatprep.subr.mxu0 0.0
    %268 = vmatpush1.msra.mxu0 %v60
    %269 = vmatprep.subr.mxu0 0.0
    %270 = vmatpush1.msra.mxu0 %v59
    %271 = vmatprep.subr.mxu0 0.0
    %272 = vmatpush1.msra.mxu0 %v58
    %273 = vmatprep.subr.mxu0 0.0
    %274 = vmatpush1.msra.mxu0 %v57
    %275 = vmatprep.subr.mxu0 0.0
    %276 = vmatpush2.msra.mxu0 %v88
    %277 = vmatprep.subr.mxu0 0.0
    %278 = vmatpush2.msra.mxu0 %v87
    %279 = vmatprep.subr.mxu0 0.0
    %280 = vmatpush2.msra.mxu0 %v86
    %281 = vmatprep.subr.mxu0 0.0
    %282 = vmatpush2.msra.mxu0 %v85
    %283 = vmatprep.subr.mxu0 0.0
    %284 = vmatpush2.msra.mxu0 %v84
    %285 = vmatprep.subr.mxu0 0.0
    %286 = vmatpush2.msra.mxu0 %v83
    %287 = vmatprep.subr.mxu0 0.0
    %288 = vmatpush2.msra.mxu0 %v82
    %289 = vmatprep.subr.mxu0 0.0
    %290 = vmatpush2.msra.mxu0 %v81
    %291 = vmatprep.subr.mxu0 0.0
    %292 = vmatpush2.msra.mxu0 %v80
    %293 = vmatprep.subr.mxu0 0.0
    %294 = vmatpush2.msra.mxu0 %v79
    %295 = vmatprep.subr.mxu0 0.0
    %296 = vmatpush2.msra.mxu0 %v78
    %297 = vmatprep.subr.mxu0 0.0
    %298 = vmatpush2.msra.mxu0 %v77
    %299 = vmatprep.subr.mxu0 0.0
    %300 = vmatpush2.msra.mxu0 %v76
    %301 = vmatprep.subr.mxu0 0.0
    %302 = vmatpush2.msra.mxu0 %v75
    %303 = vmatprep.subr.mxu0 0.0
    %304 = vmatpush2.msra.mxu0 %v74
    %305 = vmatprep.subr.mxu0 0.0
    %306 = vmatpush2.msra.mxu0 %v73
    %307 = vmatprep.mubr.f32.mxu0 %v145
    %308 = vmatmul.mubr.f32.gmra.mxu0 %v144
    %v309 = vpop.f32.mrf.mxu0
    %v310 = vadd.f32 %v225, %v309
    %v311 = vpop.f32.mrf.mxu0
    %312 = vmatprep.mubr.f32.mxu0 %v149
    %313 = vmatmul.mubr.f32.gmra.mxu0 %v148
    %v314 = vpop.f32.mrf.mxu0
    %v315 = vadd.f32 %v230, %v314
    %v316 = vpop.f32.mrf.mxu0
    %317 = vmatprep.mubr.f32.mxu0 %v153
    %318 = vmatmul.mubr.f32.gmra.mxu0 %v152
    %v319 = vpop.f32.mrf.mxu0
    %v320 = vadd.f32 %v235, %v319
    %v321 = vpop.f32.mrf.mxu0
    %322 = vmatprep.mubr.f32.mxu0 %v157
    %323 = vmatmul.mubr.f32.gmra.mxu0 %v156
    %v324 = vpop.f32.mrf.mxu0
    %v325 = vadd.f32 %v240, %v324
    %v326 = vpop.f32.mrf.mxu0
    %327 = vdwg.mxu0
    %vm328 = vcmask 261120
    %329 = vst.msk [vmem:[%s2] sm:$0xff] %vm328, %v310
    %330 = vst.msk [vmem:[%s2 + $0x8] sm:$0xff] %vm328, %v315
    %331 = vst.msk [vmem:[%s2 + $0x10] sm:$0xff] %vm328, %v320
    %332 = vst.msk [vmem:[%s2 + $0x18] sm:$0xff] %vm328, %v325
    %v333 = vld [vmem:[%s0 + $0x20] sm:$0xff]
    %v334 = vld [vmem:[%s0 + $0x28] sm:$0xff]
    %v335 = vld [vmem:[%s0 + $0x30] sm:$0xff]
    %v336 = vld [vmem:[%s0 + $0x38] sm:$0xff]
    %337 = vset.pattern.permute.xlu0 0
    %338 = vperm.xlu0 %337, %v333
    %v339 = vpop.permute.xlu0 %338
    %340 = vset.pattern.permute.xlu0 0
    %341 = vperm.xlu0 %340, %v334
    %v342 = vpop.permute.xlu0 %341
    %343 = vset.pattern.permute.xlu0 0
    %344 = vperm.xlu0 %343, %v335
    %v345 = vpop.permute.xlu0 %344
    %346 = vset.pattern.permute.xlu0 0
    %347 = vperm.xlu0 %346, %v336
    %v348 = vpop.permute.xlu0 %347
    %vm349 = vcmp.eq.s32.totalorder %v90, %v339
    %vm350 = vcmp.eq.s32.totalorder %v91, %v339
    %vm351 = vcmp.eq.s32.totalorder %v92, %v339
    %vm352 = vcmp.eq.s32.totalorder %v93, %v339
    %vm353 = vcmp.eq.s32.totalorder %v90, %v342
    %vm354 = vcmp.eq.s32.totalorder %v91, %v342
    %vm355 = vcmp.eq.s32.totalorder %v92, %v342
    %vm356 = vcmp.eq.s32.totalorder %v93, %v342
    %vm357 = vcmp.eq.s32.totalorder %v90, %v345
    %vm358 = vcmp.eq.s32.totalorder %v91, %v345
    %vm359 = vcmp.eq.s32.totalorder %v92, %v345
    %vm360 = vcmp.eq.s32.totalorder %v93, %v345
    %vm361 = vcmp.eq.s32.totalorder %v90, %v348
    %vm362 = vcmp.eq.s32.totalorder %v91, %v348
    %vm363 = vcmp.eq.s32.totalorder %v92, %v348
    %vm364 = vcmp.eq.s32.totalorder %v93, %v348
    %v365 = vsel %vm349, 1, 0
    %v366 = vsel %vm350, 1, 0
    %v367 = vsel %vm351, 1, 0
    %v368 = vsel %vm352, 1, 0
    %v369 = vsel %vm353, 1, 0
    %v370 = vsel %vm354, 1, 0
    %v371 = vsel %vm355, 1, 0
    %v372 = vsel %vm356, 1, 0
    %v373 = vsel %vm357, 1, 0
    %v374 = vsel %vm358, 1, 0
    %v375 = vsel %vm359, 1, 0
    %v376 = vsel %vm360, 1, 0
    %v377 = vsel %vm361, 1, 0
    %v378 = vsel %vm362, 1, 0
    %v379 = vsel %vm363, 1, 0
    %v380 = vsel %vm364, 1, 0
    %v381 = vcvt.s32.f32 %v365
    %v382 = vcvt.s32.f32 %v366
    %v383 = vcvt.s32.f32 %v367
    %v384 = vcvt.s32.f32 %v368
    %v385 = vcvt.s32.f32 %v369
    %v386 = vcvt.s32.f32 %v370
    %v387 = vcvt.s32.f32 %v371
    %v388 = vcvt.s32.f32 %v372
    %v389 = vcvt.s32.f32 %v373
    %v390 = vcvt.s32.f32 %v374
    %v391 = vcvt.s32.f32 %v375
    %v392 = vcvt.s32.f32 %v376
    %v393 = vcvt.s32.f32 %v377
    %v394 = vcvt.s32.f32 %v378
    %v395 = vcvt.s32.f32 %v379
    %v396 = vcvt.s32.f32 %v380
    %397 = vmatprep.subr.mxu0 0.0
    %398 = vmatpush1.msra.mxu0 %v40
    %399 = vmatprep.subr.mxu0 0.0
    %400 = vmatpush1.msra.mxu0 %v39
    %401 = vmatprep.subr.mxu0 0.0
    %402 = vmatpush1.msra.mxu0 %v38
    %403 = vmatprep.subr.mxu0 0.0
    %404 = vmatpush1.msra.mxu0 %v37
    %405 = vmatprep.subr.mxu0 0.0
    %406 = vmatpush1.msra.mxu0 %v36
    %407 = vmatprep.subr.mxu0 0.0
    %408 = vmatpush1.msra.mxu0 %v35
    %409 = vmatprep.subr.mxu0 0.0
    %410 = vmatpush1.msra.mxu0 %v34
    %411 = vmatprep.subr.mxu0 0.0
    %412 = vmatpush1.msra.mxu0 %v33
    %413 = vmatprep.subr.mxu0 0.0
    %414 = vmatpush1.msra.mxu0 %v32
    %415 = vmatprep.subr.mxu0 0.0
    %416 = vmatpush1.msra.mxu0 %v31
    %417 = vmatprep.subr.mxu0 0.0
    %418 = vmatpush1.msra.mxu0 %v30
    %419 = vmatprep.subr.mxu0 0.0
    %420 = vmatpush1.msra.mxu0 %v29
    %421 = vmatprep.subr.mxu0 0.0
    %422 = vmatpush1.msra.mxu0 %v28
    %423 = vmatprep.subr.mxu0 0.0
    %424 = vmatpush1.msra.mxu0 %v27
    %425 = vmatprep.subr.mxu0 0.0
    %426 = vmatpush1.msra.mxu0 %v26
    %427 = vmatprep.subr.mxu0 0.0
    %428 = vmatpush1.msra.mxu0 %v25
    %429 = vmatprep.subr.mxu0 0.0
    %430 = vmatpush2.msra.mxu0 %v56
    %431 = vmatprep.subr.mxu0 0.0
    %432 = vmatpush2.msra.mxu0 %v55
    %433 = vmatprep.subr.mxu0 0.0
    %434 = vmatpush2.msra.mxu0 %v54
    %435 = vmatprep.subr.mxu0 0.0
    %436 = vmatpush2.msra.mxu0 %v53
    %437 = vmatprep.subr.mxu0 0.0
    %438 = vmatpush2.msra.mxu0 %v52
    %439 = vmatprep.subr.mxu0 0.0
    %440 = vmatpush2.msra.mxu0 %v51
    %441 = vmatprep.subr.mxu0 0.0
    %442 = vmatpush2.msra.mxu0 %v50
    %443 = vmatprep.subr.mxu0 0.0
    %444 = vmatpush2.msra.mxu0 %v49
    %445 = vmatprep.subr.mxu0 0.0
    %446 = vmatpush2.msra.mxu0 %v48
    %447 = vmatprep.subr.mxu0 0.0
    %448 = vmatpush2.msra.mxu0 %v47
    %449 = vmatprep.subr.mxu0 0.0
    %450 = vmatpush2.msra.mxu0 %v46
    %451 = vmatprep.subr.mxu0 0.0
    %452 = vmatpush2.msra.mxu0 %v45
    %453 = vmatprep.subr.mxu0 0.0
    %454 = vmatpush2.msra.mxu0 %v44
    %455 = vmatprep.subr.mxu0 0.0
    %456 = vmatpush2.msra.mxu0 %v43
    %457 = vmatprep.subr.mxu0 0.0
    %458 = vmatpush2.msra.mxu0 %v42
    %459 = vmatprep.subr.mxu0 0.0
    %460 = vmatpush2.msra.mxu0 %v41
    %461 = vmatprep.mubr.f32.mxu0 %v382
    %462 = vmatmul.mubr.f32.gmra.mxu0 %v381
    %v463 = vpop.f32.mrf.mxu0
    %v464 = vadd.f32 0.0, %v463
    %v465 = vpop.f32.mrf.mxu0
    %466 = vmatprep.mubr.f32.mxu0 %v386
    %467 = vmatmul.mubr.f32.gmra.mxu0 %v385
    %v468 = vpop.f32.mrf.mxu0
    %v469 = vadd.f32 0.0, %v468
    %v470 = vpop.f32.mrf.mxu0
    %471 = vmatprep.mubr.f32.mxu0 %v390
    %472 = vmatmul.mubr.f32.gmra.mxu0 %v389
    %v473 = vpop.f32.mrf.mxu0
    %v474 = vadd.f32 0.0, %v473
    %v475 = vpop.f32.mrf.mxu0
    %476 = vmatprep.mubr.f32.mxu0 %v394
    %477 = vmatmul.mubr.f32.gmra.mxu0 %v393
    %v478 = vpop.f32.mrf.mxu0
    %v479 = vadd.f32 0.0, %v478
    %v480 = vpop.f32.mrf.mxu0
    %481 = vdwg.mxu0
    %482 = vmatprep.subr.mxu0 0.0
    %483 = vmatpush1.msra.mxu0 %v72
    %484 = vmatprep.subr.mxu0 0.0
    %485 = vmatpush1.msra.mxu0 %v71
    %486 = vmatprep.subr.mxu0 0.0
    %487 = vmatpush1.msra.mxu0 %v70
    %488 = vmatprep.subr.mxu0 0.0
    %489 = vmatpush1.msra.mxu0 %v69
    %490 = vmatprep.subr.mxu0 0.0
    %491 = vmatpush1.msra.mxu0 %v68
    %492 = vmatprep.subr.mxu0 0.0
    %493 = vmatpush1.msra.mxu0 %v67
    %494 = vmatprep.subr.mxu0 0.0
    %495 = vmatpush1.msra.mxu0 %v66
    %496 = vmatprep.subr.mxu0 0.0
    %497 = vmatpush1.msra.mxu0 %v65
    %498 = vmatprep.subr.mxu0 0.0
    %499 = vmatpush1.msra.mxu0 %v64
    %500 = vmatprep.subr.mxu0 0.0
    %501 = vmatpush1.msra.mxu0 %v63
    %502 = vmatprep.subr.mxu0 0.0
    %503 = vmatpush1.msra.mxu0 %v62
    %504 = vmatprep.subr.mxu0 0.0
    %505 = vmatpush1.msra.mxu0 %v61
    %506 = vmatprep.subr.mxu0 0.0
    %507 = vmatpush1.msra.mxu0 %v60
    %508 = vmatprep.subr.mxu0 0.0
    %509 = vmatpush1.msra.mxu0 %v59
    %510 = vmatprep.subr.mxu0 0.0
    %511 = vmatpush1.msra.mxu0 %v58
    %512 = vmatprep.subr.mxu0 0.0
    %513 = vmatpush1.msra.mxu0 %v57
    %514 = vmatprep.subr.mxu0 0.0
    %515 = vmatpush2.msra.mxu0 %v88
    %516 = vmatprep.subr.mxu0 0.0
    %517 = vmatpush2.msra.mxu0 %v87
    %518 = vmatprep.subr.mxu0 0.0
    %519 = vmatpush2.msra.mxu0 %v86
    %520 = vmatprep.subr.mxu0 0.0
    %521 = vmatpush2.msra.mxu0 %v85
    %522 = vmatprep.subr.mxu0 0.0
    %523 = vmatpush2.msra.mxu0 %v84
    %524 = vmatprep.subr.mxu0 0.0
    %525 = vmatpush2.msra.mxu0 %v83
    %526 = vmatprep.subr.mxu0 0.0
    %527 = vmatpush2.msra.mxu0 %v82
    %528 = vmatprep.subr.mxu0 0.0
    %529 = vmatpush2.msra.mxu0 %v81
    %530 = vmatprep.subr.mxu0 0.0
    %531 = vmatpush2.msra.mxu0 %v80
    %532 = vmatprep.subr.mxu0 0.0
    %533 = vmatpush2.msra.mxu0 %v79
    %534 = vmatprep.subr.mxu0 0.0
    %535 = vmatpush2.msra.mxu0 %v78
    %536 = vmatprep.subr.mxu0 0.0
    %537 = vmatpush2.msra.mxu0 %v77
    %538 = vmatprep.subr.mxu0 0.0
    %539 = vmatpush2.msra.mxu0 %v76
    %540 = vmatprep.subr.mxu0 0.0
    %541 = vmatpush2.msra.mxu0 %v75
    %542 = vmatprep.subr.mxu0 0.0
    %543 = vmatpush2.msra.mxu0 %v74
    %544 = vmatprep.subr.mxu0 0.0
    %545 = vmatpush2.msra.mxu0 %v73
    %546 = vmatprep.mubr.f32.mxu0 %v384
    %547 = vmatmul.mubr.f32.gmra.mxu0 %v383
    %v548 = vpop.f32.mrf.mxu0
    %v549 = vadd.f32 %v464, %v548
    %v550 = vpop.f32.mrf.mxu0
    %551 = vmatprep.mubr.f32.mxu0 %v388
    %552 = vmatmul.mubr.f32.gmra.mxu0 %v387
    %v553 = vpop.f32.mrf.mxu0
    %v554 = vadd.f32 %v469, %v553
    %v555 = vpop.f32.mrf.mxu0
    %556 = vmatprep.mubr.f32.mxu0 %v392
    %557 = vmatmul.mubr.f32.gmra.mxu0 %v391
    %v558 = vpop.f32.mrf.mxu0
    %v559 = vadd.f32 %v474, %v558
    %v560 = vpop.f32.mrf.mxu0
    %561 = vmatprep.mubr.f32.mxu0 %v396
    %562 = vmatmul.mubr.f32.gmra.mxu0 %v395
    %v563 = vpop.f32.mrf.mxu0
    %v564 = vadd.f32 %v479, %v563
    %v565 = vpop.f32.mrf.mxu0
    %566 = vdwg.mxu0
    %571 = vrot.lane.b32.xlu0 %v549, 32
    %v572 = vpop.permute.xlu0 %571
    %573 = vrot.lane.b32.xlu0 %v554, 32
    %v574 = vpop.permute.xlu0 %573
    %575 = vrot.lane.b32.xlu0 %v559, 32
    %v576 = vpop.permute.xlu0 %575
    %577 = vrot.lane.b32.xlu0 %v564, 32
    %v578 = vpop.permute.xlu0 %577
    %vm583 = vcmask 523520
    %584 = vst.msk [vmem:[%s2] sm:$0xff] %vm583, %v572
    %585 = vst.msk [vmem:[%s2 + $0x8] sm:$0xff] %vm583, %v574
    %586 = vst.msk [vmem:[%s2 + $0x10] sm:$0xff] %vm583, %v576
    %587 = vst.msk [vmem:[%s2 + $0x18] sm:$0xff] %vm583, %v578
    %v588 = vld [vmem:[%s0 + $0x40] sm:$0xff]
    %v589 = vld [vmem:[%s0 + $0x48] sm:$0xff]
    %v590 = vld [vmem:[%s0 + $0x50] sm:$0xff]
    %v591 = vld [vmem:[%s0 + $0x58] sm:$0xff]
    %592 = vset.pattern.permute.xlu0 0
    %593 = vperm.xlu0 %592, %v588
    %v594 = vpop.permute.xlu0 %593
    %595 = vset.pattern.permute.xlu0 0
    %596 = vperm.xlu0 %595, %v589
    %v597 = vpop.permute.xlu0 %596
    %598 = vset.pattern.permute.xlu0 0
    %599 = vperm.xlu0 %598, %v590
    %v600 = vpop.permute.xlu0 %599
    %601 = vset.pattern.permute.xlu0 0
    %602 = vperm.xlu0 %601, %v591
    %v603 = vpop.permute.xlu0 %602
    %vm604 = vcmp.eq.s32.totalorder %v90, %v594
    %vm605 = vcmp.eq.s32.totalorder %v91, %v594
    %vm606 = vcmp.eq.s32.totalorder %v92, %v594
    %vm607 = vcmp.eq.s32.totalorder %v93, %v594
    %vm608 = vcmp.eq.s32.totalorder %v90, %v597
    %vm609 = vcmp.eq.s32.totalorder %v91, %v597
    %vm610 = vcmp.eq.s32.totalorder %v92, %v597
    %vm611 = vcmp.eq.s32.totalorder %v93, %v597
    %vm612 = vcmp.eq.s32.totalorder %v90, %v600
    %vm613 = vcmp.eq.s32.totalorder %v91, %v600
    %vm614 = vcmp.eq.s32.totalorder %v92, %v600
    %vm615 = vcmp.eq.s32.totalorder %v93, %v600
    %vm616 = vcmp.eq.s32.totalorder %v90, %v603
    %vm617 = vcmp.eq.s32.totalorder %v91, %v603
    %vm618 = vcmp.eq.s32.totalorder %v92, %v603
    %vm619 = vcmp.eq.s32.totalorder %v93, %v603
    %v620 = vsel %vm604, 1, 0
    %v621 = vsel %vm605, 1, 0
    %v622 = vsel %vm606, 1, 0
    %v623 = vsel %vm607, 1, 0
    %v624 = vsel %vm608, 1, 0
    %v625 = vsel %vm609, 1, 0
    %v626 = vsel %vm610, 1, 0
    %v627 = vsel %vm611, 1, 0
    %v628 = vsel %vm612, 1, 0
    %v629 = vsel %vm613, 1, 0
    %v630 = vsel %vm614, 1, 0
    %v631 = vsel %vm615, 1, 0
    %v632 = vsel %vm616, 1, 0
    %v633 = vsel %vm617, 1, 0
    %v634 = vsel %vm618, 1, 0
    %v635 = vsel %vm619, 1, 0
    %v636 = vcvt.s32.f32 %v620
    %v637 = vcvt.s32.f32 %v621
    %v638 = vcvt.s32.f32 %v622
    %v639 = vcvt.s32.f32 %v623
    %v640 = vcvt.s32.f32 %v624
    %v641 = vcvt.s32.f32 %v625
    %v642 = vcvt.s32.f32 %v626
    %v643 = vcvt.s32.f32 %v627
    %v644 = vcvt.s32.f32 %v628
    %v645 = vcvt.s32.f32 %v629
    %v646 = vcvt.s32.f32 %v630
    %v647 = vcvt.s32.f32 %v631
    %v648 = vcvt.s32.f32 %v632
    %v649 = vcvt.s32.f32 %v633
    %v650 = vcvt.s32.f32 %v634
    %v651 = vcvt.s32.f32 %v635
    %652 = vmatprep.subr.mxu0 0.0
    %653 = vmatpush1.msra.mxu0 %v40
    %654 = vmatprep.subr.mxu0 0.0
    %655 = vmatpush1.msra.mxu0 %v39
    %656 = vmatprep.subr.mxu0 0.0
    %657 = vmatpush1.msra.mxu0 %v38
    %658 = vmatprep.subr.mxu0 0.0
    %659 = vmatpush1.msra.mxu0 %v37
    %660 = vmatprep.subr.mxu0 0.0
    %661 = vmatpush1.msra.mxu0 %v36
    %662 = vmatprep.subr.mxu0 0.0
    %663 = vmatpush1.msra.mxu0 %v35
    %664 = vmatprep.subr.mxu0 0.0
    %665 = vmatpush1.msra.mxu0 %v34
    %666 = vmatprep.subr.mxu0 0.0
    %667 = vmatpush1.msra.mxu0 %v33
    %668 = vmatprep.subr.mxu0 0.0
    %669 = vmatpush1.msra.mxu0 %v32
    %670 = vmatprep.subr.mxu0 0.0
    %671 = vmatpush1.msra.mxu0 %v31
    %672 = vmatprep.subr.mxu0 0.0
    %673 = vmatpush1.msra.mxu0 %v30
    %674 = vmatprep.subr.mxu0 0.0
    %675 = vmatpush1.msra.mxu0 %v29
    %676 = vmatprep.subr.mxu0 0.0
    %677 = vmatpush1.msra.mxu0 %v28
    %678 = vmatprep.subr.mxu0 0.0
    %679 = vmatpush1.msra.mxu0 %v27
    %680 = vmatprep.subr.mxu0 0.0
    %681 = vmatpush1.msra.mxu0 %v26
    %682 = vmatprep.subr.mxu0 0.0
    %683 = vmatpush1.msra.mxu0 %v25
    %684 = vmatprep.subr.mxu0 0.0
    %685 = vmatpush2.msra.mxu0 %v56
    %686 = vmatprep.subr.mxu0 0.0
    %687 = vmatpush2.msra.mxu0 %v55
    %688 = vmatprep.subr.mxu0 0.0
    %689 = vmatpush2.msra.mxu0 %v54
    %690 = vmatprep.subr.mxu0 0.0
    %691 = vmatpush2.msra.mxu0 %v53
    %692 = vmatprep.subr.mxu0 0.0
    %693 = vmatpush2.msra.mxu0 %v52
    %694 = vmatprep.subr.mxu0 0.0
    %695 = vmatpush2.msra.mxu0 %v51
    %696 = vmatprep.subr.mxu0 0.0
    %697 = vmatpush2.msra.mxu0 %v50
    %698 = vmatprep.subr.mxu0 0.0
    %699 = vmatpush2.msra.mxu0 %v49
    %700 = vmatprep.subr.mxu0 0.0
    %701 = vmatpush2.msra.mxu0 %v48
    %702 = vmatprep.subr.mxu0 0.0
    %703 = vmatpush2.msra.mxu0 %v47
    %704 = vmatprep.subr.mxu0 0.0
    %705 = vmatpush2.msra.mxu0 %v46
    %706 = vmatprep.subr.mxu0 0.0
    %707 = vmatpush2.msra.mxu0 %v45
    %708 = vmatprep.subr.mxu0 0.0
    %709 = vmatpush2.msra.mxu0 %v44
    %710 = vmatprep.subr.mxu0 0.0
    %711 = vmatpush2.msra.mxu0 %v43
    %712 = vmatprep.subr.mxu0 0.0
    %713 = vmatpush2.msra.mxu0 %v42
    %714 = vmatprep.subr.mxu0 0.0
    %715 = vmatpush2.msra.mxu0 %v41
    %716 = vmatprep.mubr.f32.mxu0 %v637
    %717 = vmatmul.mubr.f32.gmra.mxu0 %v636
    %v718 = vpop.f32.mrf.mxu0
    %v719 = vadd.f32 0.0, %v718
    %v720 = vpop.f32.mrf.mxu0
    %721 = vmatprep.mubr.f32.mxu0 %v641
    %722 = vmatmul.mubr.f32.gmra.mxu0 %v640
    %v723 = vpop.f32.mrf.mxu0
    %v724 = vadd.f32 0.0, %v723
    %v725 = vpop.f32.mrf.mxu0
    %726 = vmatprep.mubr.f32.mxu0 %v645
    %727 = vmatmul.mubr.f32.gmra.mxu0 %v644
    %v728 = vpop.f32.mrf.mxu0
    %v729 = vadd.f32 0.0, %v728
    %v730 = vpop.f32.mrf.mxu0
    %731 = vmatprep.mubr.f32.mxu0 %v649
    %732 = vmatmul.mubr.f32.gmra.mxu0 %v648
    %v733 = vpop.f32.mrf.mxu0
    %v734 = vadd.f32 0.0, %v733
    %v735 = vpop.f32.mrf.mxu0
    %736 = vdwg.mxu0
    %737 = vmatprep.subr.mxu0 0.0
    %738 = vmatpush1.msra.mxu0 %v72
    %739 = vmatprep.subr.mxu0 0.0
    %740 = vmatpush1.msra.mxu0 %v71
    %741 = vmatprep.subr.mxu0 0.0
    %742 = vmatpush1.msra.mxu0 %v70
    %743 = vmatprep.subr.mxu0 0.0
    %744 = vmatpush1.msra.mxu0 %v69
    %745 = vmatprep.subr.mxu0 0.0
    %746 = vmatpush1.msra.mxu0 %v68
    %747 = vmatprep.subr.mxu0 0.0
    %748 = vmatpush1.msra.mxu0 %v67
    %749 = vmatprep.subr.mxu0 0.0
    %750 = vmatpush1.msra.mxu0 %v66
    %751 = vmatprep.subr.mxu0 0.0
    %752 = vmatpush1.msra.mxu0 %v65
    %753 = vmatprep.subr.mxu0 0.0
    %754 = vmatpush1.msra.mxu0 %v64
    %755 = vmatprep.subr.mxu0 0.0
    %756 = vmatpush1.msra.mxu0 %v63
    %757 = vmatprep.subr.mxu0 0.0
    %758 = vmatpush1.msra.mxu0 %v62
    %759 = vmatprep.subr.mxu0 0.0
    %760 = vmatpush1.msra.mxu0 %v61
    %761 = vmatprep.subr.mxu0 0.0
    %762 = vmatpush1.msra.mxu0 %v60
    %763 = vmatprep.subr.mxu0 0.0
    %764 = vmatpush1.msra.mxu0 %v59
    %765 = vmatprep.subr.mxu0 0.0
    %766 = vmatpush1.msra.mxu0 %v58
    %767 = vmatprep.subr.mxu0 0.0
    %768 = vmatpush1.msra.mxu0 %v57
    %769 = vmatprep.subr.mxu0 0.0
    %770 = vmatpush2.msra.mxu0 %v88
    %771 = vmatprep.subr.mxu0 0.0
    %772 = vmatpush2.msra.mxu0 %v87
    %773 = vmatprep.subr.mxu0 0.0
    %774 = vmatpush2.msra.mxu0 %v86
    %775 = vmatprep.subr.mxu0 0.0
    %776 = vmatpush2.msra.mxu0 %v85
    %777 = vmatprep.subr.mxu0 0.0
    %778 = vmatpush2.msra.mxu0 %v84
    %779 = vmatprep.subr.mxu0 0.0
    %780 = vmatpush2.msra.mxu0 %v83
    %781 = vmatprep.subr.mxu0 0.0
    %782 = vmatpush2.msra.mxu0 %v82
    %783 = vmatprep.subr.mxu0 0.0
    %784 = vmatpush2.msra.mxu0 %v81
    %785 = vmatprep.subr.mxu0 0.0
    %786 = vmatpush2.msra.mxu0 %v80
    %787 = vmatprep.subr.mxu0 0.0
    %788 = vmatpush2.msra.mxu0 %v79
    %789 = vmatprep.subr.mxu0 0.0
    %790 = vmatpush2.msra.mxu0 %v78
    %791 = vmatprep.subr.mxu0 0.0
    %792 = vmatpush2.msra.mxu0 %v77
    %793 = vmatprep.subr.mxu0 0.0
    %794 = vmatpush2.msra.mxu0 %v76
    %795 = vmatprep.subr.mxu0 0.0
    %796 = vmatpush2.msra.mxu0 %v75
    %797 = vmatprep.subr.mxu0 0.0
    %798 = vmatpush2.msra.mxu0 %v74
    %799 = vmatprep.subr.mxu0 0.0
    %800 = vmatpush2.msra.mxu0 %v73
    %801 = vmatprep.mubr.f32.mxu0 %v639
    %802 = vmatmul.mubr.f32.gmra.mxu0 %v638
    %v803 = vpop.f32.mrf.mxu0
    %v804 = vadd.f32 %v719, %v803
    %v805 = vpop.f32.mrf.mxu0
    %806 = vmatprep.mubr.f32.mxu0 %v643
    %807 = vmatmul.mubr.f32.gmra.mxu0 %v642
    %v808 = vpop.f32.mrf.mxu0
    %v809 = vadd.f32 %v724, %v808
    %v810 = vpop.f32.mrf.mxu0
    %811 = vmatprep.mubr.f32.mxu0 %v647
    %812 = vmatmul.mubr.f32.gmra.mxu0 %v646
    %v813 = vpop.f32.mrf.mxu0
    %v814 = vadd.f32 %v729, %v813
    %v815 = vpop.f32.mrf.mxu0
    %816 = vmatprep.mubr.f32.mxu0 %v651
    %817 = vmatmul.mubr.f32.gmra.mxu0 %v650
    %v818 = vpop.f32.mrf.mxu0
    %v819 = vadd.f32 %v734, %v818
    %v820 = vpop.f32.mrf.mxu0
    %821 = vdwg.mxu0
    %826 = vrot.lane.b32.xlu0 %v804, 64
    %v827 = vpop.permute.xlu0 %826
    %828 = vrot.lane.b32.xlu0 %v809, 64
    %v829 = vpop.permute.xlu0 %828
    %830 = vrot.lane.b32.xlu0 %v814, 64
    %v831 = vpop.permute.xlu0 %830
    %832 = vrot.lane.b32.xlu0 %v819, 64
    %v833 = vpop.permute.xlu0 %832
    %vm838 = vcmask 785920
    %839 = vst.msk [vmem:[%s2] sm:$0xff] %vm838, %v827
    %840 = vst.msk [vmem:[%s2 + $0x8] sm:$0xff] %vm838, %v829
    %841 = vst.msk [vmem:[%s2 + $0x10] sm:$0xff] %vm838, %v831
    %842 = vst.msk [vmem:[%s2 + $0x18] sm:$0xff] %vm838, %v833
    %v843 = vld [vmem:[%s0 + $0x60] sm:$0xff]
    %v844 = vld [vmem:[%s0 + $0x68] sm:$0xff]
    %v845 = vld [vmem:[%s0 + $0x70] sm:$0xff]
    %v846 = vld [vmem:[%s0 + $0x78] sm:$0xff]
    %847 = vset.pattern.permute.xlu0 0
    %848 = vperm.xlu0 %847, %v843
    %v849 = vpop.permute.xlu0 %848
    %850 = vset.pattern.permute.xlu0 0
    %851 = vperm.xlu0 %850, %v844
    %v852 = vpop.permute.xlu0 %851
    %853 = vset.pattern.permute.xlu0 0
    %854 = vperm.xlu0 %853, %v845
    %v855 = vpop.permute.xlu0 %854
    %856 = vset.pattern.permute.xlu0 0
    %857 = vperm.xlu0 %856, %v846
    %v858 = vpop.permute.xlu0 %857
    %vm859 = vcmp.eq.s32.totalorder %v90, %v849
    %vm860 = vcmp.eq.s32.totalorder %v91, %v849
    %vm861 = vcmp.eq.s32.totalorder %v92, %v849
    %vm862 = vcmp.eq.s32.totalorder %v93, %v849
    %vm863 = vcmp.eq.s32.totalorder %v90, %v852
    %vm864 = vcmp.eq.s32.totalorder %v91, %v852
    %vm865 = vcmp.eq.s32.totalorder %v92, %v852
    %vm866 = vcmp.eq.s32.totalorder %v93, %v852
    %vm867 = vcmp.eq.s32.totalorder %v90, %v855
    %vm868 = vcmp.eq.s32.totalorder %v91, %v855
    %vm869 = vcmp.eq.s32.totalorder %v92, %v855
    %vm870 = vcmp.eq.s32.totalorder %v93, %v855
    %vm871 = vcmp.eq.s32.totalorder %v90, %v858
    %vm872 = vcmp.eq.s32.totalorder %v91, %v858
    %vm873 = vcmp.eq.s32.totalorder %v92, %v858
    %vm874 = vcmp.eq.s32.totalorder %v93, %v858
    %v875 = vsel %vm859, 1, 0
    %v876 = vsel %vm860, 1, 0
    %v877 = vsel %vm861, 1, 0
    %v878 = vsel %vm862, 1, 0
    %v879 = vsel %vm863, 1, 0
    %v880 = vsel %vm864, 1, 0
    %v881 = vsel %vm865, 1, 0
    %v882 = vsel %vm866, 1, 0
    %v883 = vsel %vm867, 1, 0
    %v884 = vsel %vm868, 1, 0
    %v885 = vsel %vm869, 1, 0
    %v886 = vsel %vm870, 1, 0
    %v887 = vsel %vm871, 1, 0
    %v888 = vsel %vm872, 1, 0
    %v889 = vsel %vm873, 1, 0
    %v890 = vsel %vm874, 1, 0
    %v891 = vcvt.s32.f32 %v875
    %v892 = vcvt.s32.f32 %v876
    %v893 = vcvt.s32.f32 %v877
    %v894 = vcvt.s32.f32 %v878
    %v895 = vcvt.s32.f32 %v879
    %v896 = vcvt.s32.f32 %v880
    %v897 = vcvt.s32.f32 %v881
    %v898 = vcvt.s32.f32 %v882
    %v899 = vcvt.s32.f32 %v883
    %v900 = vcvt.s32.f32 %v884
    %v901 = vcvt.s32.f32 %v885
    %v902 = vcvt.s32.f32 %v886
    %v903 = vcvt.s32.f32 %v887
    %v904 = vcvt.s32.f32 %v888
    %v905 = vcvt.s32.f32 %v889
    %v906 = vcvt.s32.f32 %v890
    %907 = vmatprep.subr.mxu0 0.0
    %908 = vmatpush1.msra.mxu0 %v40
    %909 = vmatprep.subr.mxu0 0.0
    %910 = vmatpush1.msra.mxu0 %v39
    %911 = vmatprep.subr.mxu0 0.0
    %912 = vmatpush1.msra.mxu0 %v38
    %913 = vmatprep.subr.mxu0 0.0
    %914 = vmatpush1.msra.mxu0 %v37
    %915 = vmatprep.subr.mxu0 0.0
    %916 = vmatpush1.msra.mxu0 %v36
    %917 = vmatprep.subr.mxu0 0.0
    %918 = vmatpush1.msra.mxu0 %v35
    %919 = vmatprep.subr.mxu0 0.0
    %920 = vmatpush1.msra.mxu0 %v34
    %921 = vmatprep.subr.mxu0 0.0
    %922 = vmatpush1.msra.mxu0 %v33
    %923 = vmatprep.subr.mxu0 0.0
    %924 = vmatpush1.msra.mxu0 %v32
    %925 = vmatprep.subr.mxu0 0.0
    %926 = vmatpush1.msra.mxu0 %v31
    %927 = vmatprep.subr.mxu0 0.0
    %928 = vmatpush1.msra.mxu0 %v30
    %929 = vmatprep.subr.mxu0 0.0
    %930 = vmatpush1.msra.mxu0 %v29
    %931 = vmatprep.subr.mxu0 0.0
    %932 = vmatpush1.msra.mxu0 %v28
    %933 = vmatprep.subr.mxu0 0.0
    %934 = vmatpush1.msra.mxu0 %v27
    %935 = vmatprep.subr.mxu0 0.0
    %936 = vmatpush1.msra.mxu0 %v26
    %937 = vmatprep.subr.mxu0 0.0
    %938 = vmatpush1.msra.mxu0 %v25
    %939 = vmatprep.subr.mxu0 0.0
    %940 = vmatpush2.msra.mxu0 %v56
    %941 = vmatprep.subr.mxu0 0.0
    %942 = vmatpush2.msra.mxu0 %v55
    %943 = vmatprep.subr.mxu0 0.0
    %944 = vmatpush2.msra.mxu0 %v54
    %945 = vmatprep.subr.mxu0 0.0
    %946 = vmatpush2.msra.mxu0 %v53
    %947 = vmatprep.subr.mxu0 0.0
    %948 = vmatpush2.msra.mxu0 %v52
    %949 = vmatprep.subr.mxu0 0.0
    %950 = vmatpush2.msra.mxu0 %v51
    %951 = vmatprep.subr.mxu0 0.0
    %952 = vmatpush2.msra.mxu0 %v50
    %953 = vmatprep.subr.mxu0 0.0
    %954 = vmatpush2.msra.mxu0 %v49
    %955 = vmatprep.subr.mxu0 0.0
    %956 = vmatpush2.msra.mxu0 %v48
    %957 = vmatprep.subr.mxu0 0.0
    %958 = vmatpush2.msra.mxu0 %v47
    %959 = vmatprep.subr.mxu0 0.0
    %960 = vmatpush2.msra.mxu0 %v46
    %961 = vmatprep.subr.mxu0 0.0
    %962 = vmatpush2.msra.mxu0 %v45
    %963 = vmatprep.subr.mxu0 0.0
    %964 = vmatpush2.msra.mxu0 %v44
    %965 = vmatprep.subr.mxu0 0.0
    %966 = vmatpush2.msra.mxu0 %v43
    %967 = vmatprep.subr.mxu0 0.0
    %968 = vmatpush2.msra.mxu0 %v42
    %969 = vmatprep.subr.mxu0 0.0
    %970 = vmatpush2.msra.mxu0 %v41
    %971 = vmatprep.mubr.f32.mxu0 %v892
    %972 = vmatmul.mubr.f32.gmra.mxu0 %v891
    %v973 = vpop.f32.mrf.mxu0
    %v974 = vadd.f32 0.0, %v973
    %v975 = vpop.f32.mrf.mxu0
    %976 = vmatprep.mubr.f32.mxu0 %v896
    %977 = vmatmul.mubr.f32.gmra.mxu0 %v895
    %v978 = vpop.f32.mrf.mxu0
    %v979 = vadd.f32 0.0, %v978
    %v980 = vpop.f32.mrf.mxu0
    %981 = vmatprep.mubr.f32.mxu0 %v900
    %982 = vmatmul.mubr.f32.gmra.mxu0 %v899
    %v983 = vpop.f32.mrf.mxu0
    %v984 = vadd.f32 0.0, %v983
    %v985 = vpop.f32.mrf.mxu0
    %986 = vmatprep.mubr.f32.mxu0 %v904
    %987 = vmatmul.mubr.f32.gmra.mxu0 %v903
    %v988 = vpop.f32.mrf.mxu0
    %v989 = vadd.f32 0.0, %v988
    %v990 = vpop.f32.mrf.mxu0
    %991 = vdwg.mxu0
    %992 = vmatprep.subr.mxu0 0.0
    %993 = vmatpush1.msra.mxu0 %v72
    %994 = vmatprep.subr.mxu0 0.0
    %995 = vmatpush1.msra.mxu0 %v71
    %996 = vmatprep.subr.mxu0 0.0
    %997 = vmatpush1.msra.mxu0 %v70
    %998 = vmatprep.subr.mxu0 0.0
    %999 = vmatpush1.msra.mxu0 %v69
    %1000 = vmatprep.subr.mxu0 0.0
    %1001 = vmatpush1.msra.mxu0 %v68
    %1002 = vmatprep.subr.mxu0 0.0
    %1003 = vmatpush1.msra.mxu0 %v67
    %1004 = vmatprep.subr.mxu0 0.0
    %1005 = vmatpush1.msra.mxu0 %v66
    %1006 = vmatprep.subr.mxu0 0.0
    %1007 = vmatpush1.msra.mxu0 %v65
    %1008 = vmatprep.subr.mxu0 0.0
    %1009 = vmatpush1.msra.mxu0 %v64
    %1010 = vmatprep.subr.mxu0 0.0
    %1011 = vmatpush1.msra.mxu0 %v63
    %1012 = vmatprep.subr.mxu0 0.0
    %1013 = vmatpush1.msra.mxu0 %v62
    %1014 = vmatprep.subr.mxu0 0.0
    %1015 = vmatpush1.msra.mxu0 %v61
    %1016 = vmatprep.subr.mxu0 0.0
    %1017 = vmatpush1.msra.mxu0 %v60
    %1018 = vmatprep.subr.mxu0 0.0
    %1019 = vmatpush1.msra.mxu0 %v59
    %1020 = vmatprep.subr.mxu0 0.0
    %1021 = vmatpush1.msra.mxu0 %v58
    %1022 = vmatprep.subr.mxu0 0.0
    %1023 = vmatpush1.msra.mxu0 %v57
    %1024 = vmatprep.subr.mxu0 0.0
    %1025 = vmatpush2.msra.mxu0 %v88
    %1026 = vmatprep.subr.mxu0 0.0
    %1027 = vmatpush2.msra.mxu0 %v87
    %1028 = vmatprep.subr.mxu0 0.0
    %1029 = vmatpush2.msra.mxu0 %v86
    %1030 = vmatprep.subr.mxu0 0.0
    %1031 = vmatpush2.msra.mxu0 %v85
    %1032 = vmatprep.subr.mxu0 0.0
    %1033 = vmatpush2.msra.mxu0 %v84
    %1034 = vmatprep.subr.mxu0 0.0
    %1035 = vmatpush2.msra.mxu0 %v83
    %1036 = vmatprep.subr.mxu0 0.0
    %1037 = vmatpush2.msra.mxu0 %v82
    %1038 = vmatprep.subr.mxu0 0.0
    %1039 = vmatpush2.msra.mxu0 %v81
    %1040 = vmatprep.subr.mxu0 0.0
    %1041 = vmatpush2.msra.mxu0 %v80
    %1042 = vmatprep.subr.mxu0 0.0
    %1043 = vmatpush2.msra.mxu0 %v79
    %1044 = vmatprep.subr.mxu0 0.0
    %1045 = vmatpush2.msra.mxu0 %v78
    %1046 = vmatprep.subr.mxu0 0.0
    %1047 = vmatpush2.msra.mxu0 %v77
    %1048 = vmatprep.subr.mxu0 0.0
    %1049 = vmatpush2.msra.mxu0 %v76
    %1050 = vmatprep.subr.mxu0 0.0
    %1051 = vmatpush2.msra.mxu0 %v75
    %1052 = vmatprep.subr.mxu0 0.0
    %1053 = vmatpush2.msra.mxu0 %v74
    %1054 = vmatprep.subr.mxu0 0.0
    %1055 = vmatpush2.msra.mxu0 %v73
    %1056 = vmatprep.mubr.f32.mxu0 %v894
    %1057 = vmatmul.mubr.f32.gmra.mxu0 %v893
    %v1058 = vpop.f32.mrf.mxu0
    %v1059 = vadd.f32 %v974, %v1058
    %v1060 = vpop.f32.mrf.mxu0
    %1061 = vmatprep.mubr.f32.mxu0 %v898
    %1062 = vmatmul.mubr.f32.gmra.mxu0 %v897
    %v1063 = vpop.f32.mrf.mxu0
    %v1064 = vadd.f32 %v979, %v1063
    %v1065 = vpop.f32.mrf.mxu0
    %1066 = vmatprep.mubr.f32.mxu0 %v902
    %1067 = vmatmul.mubr.f32.gmra.mxu0 %v901
    %v1068 = vpop.f32.mrf.mxu0
    %v1069 = vadd.f32 %v984, %v1068
    %v1070 = vpop.f32.mrf.mxu0
    %1071 = vmatprep.mubr.f32.mxu0 %v906
    %1072 = vmatmul.mubr.f32.gmra.mxu0 %v905
    %v1073 = vpop.f32.mrf.mxu0
    %v1074 = vadd.f32 %v989, %v1073
    %v1075 = vpop.f32.mrf.mxu0
    %1076 = vdwg.mxu0
    %1081 = vrot.lane.b32.xlu0 %v1059, 96
    %v1082 = vpop.permute.xlu0 %1081
    %1083 = vrot.lane.b32.xlu0 %v1064, 96
    %v1084 = vpop.permute.xlu0 %1083
    %1085 = vrot.lane.b32.xlu0 %v1069, 96
    %v1086 = vpop.permute.xlu0 %1085
    %1087 = vrot.lane.b32.xlu0 %v1074, 96
    %v1088 = vpop.permute.xlu0 %1087
    %vm1093 = vcmask 1048320
    %1094 = vst.msk [vmem:[%s2] sm:$0xff] %vm1093, %v1082
    %1095 = vst.msk [vmem:[%s2 + $0x8] sm:$0xff] %vm1093, %v1084
    %1096 = vst.msk [vmem:[%s2 + $0x10] sm:$0xff] %vm1093, %v1086
    %1097 = vst.msk [vmem:[%s2 + $0x18] sm:$0xff] %vm1093, %v1088
    // Predicated region
    $region14: #{features_embedding_forward.1} parent=1 // pred_check
      _
    $region15: #{features_embedding_forward.1} parent=1 // pred_check_branch
      %1099 = sbr.rel (0) target = $region17
    $region16: #{features_embedding_forward.1} parent=1 // pred_region
      _
    $region17: #{features_embedding_forward.1} parent=1 // pred_fallthru
      _
    // Predicated region
    $region18: #{features_embedding_forward.1} parent=1 // pred_check
      _
    $region19: #{features_embedding_forward.1} parent=1 // pred_check_branch
      %1101 = sbr.rel (0) target = $region21
    $region20: #{features_embedding_forward.1} parent=1 // pred_region
      _
    $region21: #{features_embedding_forward.1} parent=1 // pred_fallthru
      _
    %1102 = vsyncpa [#allocation3], 1

</llo_original>
